<compile_context>
chip_gen: v7x
topology: tpu7x:2x2x1
jax: 0.10.0
libtpu: 0.0.40
codegen_flags: <defaults>
</compile_context>

<pallas_src>
import functools
import math

import jax
import jax.numpy as jnp
from jax import lax
from jax.experimental import pallas as pl
from jax.experimental.pallas import tpu as pltpu


_VMEM_LIMIT_BYTES = 40 * 1024 * 1024      # safe: v5e/v6e 128 MiB, v7x 64 MiB physical
_DEFAULT_BUFFER_BYTES = 6 * 1024 * 1024   # per-input pipeline buffer (2 in x 2 bufs = 24 MiB)


def _round_up(x, m):
    return (x + m - 1) // m * m


def _cdiv(a, b):
    return -(-a // b)


def _sublane(dtype):
    # Sublane multiple of the native (sublane, 128) tile for this dtype:
    # f32 -> 8, bf16 -> 16, int8/fp8 -> 32.
    return max(8, 32 // jnp.dtype(dtype).itemsize)


def _normalize_power(p):
    # Keep integer powers (incl. 2.0, numpy ints) on the VPU integer_pow path
    # instead of the EUP exp/log general-pow path.
    try:
        pf = float(p)
        if pf == int(pf):
            return int(pf)
    except (TypeError, ValueError):
        pass
    return p


def _pow(x, power):
    if power == 2:
        return x * x
    if isinstance(power, int):
        return lax.integer_pow(x, power)
    return x ** power


def _tree_sum(parts):
    # Balanced pairwise adds (short dependency chains, pure VALU).
    while len(parts) > 1:
        nxt = [parts[i] + parts[i + 1] for i in range(0, len(parts) - 1, 2)]
        if len(parts) % 2:
            nxt.append(parts[-1])
        parts = nxt
    return parts[0]


def _accumulate(p, t, num_acc, den_acc, power):
    """Accumulate dice partial sums of (rows, ts) f32 values into f32 scratch.

    When the accumulator is lane-dense ((rows, 128)) the per-step reduction is
    done with 128-lane-aligned static slices + pairwise adds (no per-step
    cross-lane XLU reduce, no 1-lane masked scratch stores).  The narrow
    ((rows, 1)) accumulator is only used for tiny full-extent tiles whose
    width is not a multiple of 128.
    """
    rows, ts = p.shape
    if num_acc.shape[-1] == 1:
        num_acc[...] += jnp.sum(p * t, axis=1, keepdims=True)
        den_acc[...] += jnp.sum(_pow(p, power) + _pow(t, power), axis=1, keepdims=True)
        return
    assert ts % 128 == 0
    nparts, dparts = [], []
    for i in range(ts // 128):
        pc = p[:, i * 128:(i + 1) * 128]
        tc = t[:, i * 128:(i + 1) * 128]
        nparts.append(pc * tc)
        dparts.append(_pow(pc, power) + _pow(tc, power))
    num_acc[...] += _tree_sum(nparts)
    den_acc[...] += _tree_sum(dparts)


# ---------------------------------------------------------------------------
# Fused softmax + dice kernel (DiceLoss forward)
# ---------------------------------------------------------------------------

def _fused_dice_kernel(p_ref, t_ref, out_ref, num_acc, den_acc, *,
                       smooth, power, s_total, masked):
    """Grid = (N [parallel], spatial_tiles [reduction]).

    Each step streams a (C, tile_s) slab of logits + targets in native dtype,
    computes the channel softmax in-register (fused), and accumulates
    per-class num/den in persistent f32 scratch.  On the last spatial tile it
    writes loss[c] = 1 - (num + smooth) / (den + smooth).
    """
    k = pl.program_id(1)

    @pl.when(k == 0)
    def _init():
        num_acc[...] = jnp.zeros_like(num_acc)
        den_acc[...] = jnp.zeros_like(den_acc)

    c, ts = p_ref.shape
    x = p_ref[...].astype(jnp.float32)
    if masked:
        col = lax.broadcasted_iota(jnp.int32, (c, ts), 1) + k * ts
        valid = col < s_total
        x = jnp.where(valid, x, 0.0)

    # Numerically stable softmax over the class (sublane) axis.
    m = jnp.max(x, axis=0, keepdims=True)
    e = jnp.exp(x - m)
    probs = e / jnp.sum(e, axis=0, keepdims=True)

    t = t_ref[...].astype(jnp.float32)
    if masked:
        probs = jnp.where(valid, probs, 0.0)
        t = jnp.where(valid, t, 0.0)

    _accumulate(probs, t, num_acc, den_acc, power)

    @pl.when(k == pl.num_programs(1) - 1)
    def _finalize():
        num = jnp.sum(num_acc[...], axis=1, keepdims=True) + jnp.float32(smooth)
        den = jnp.sum(den_acc[...], axis=1, keepdims=True) + jnp.float32(smooth)
        out_ref[...] = (1.0 - num / den).astype(out_ref.dtype)


def _fused_dice(pr, tg, *, smooth, power, target_buffer_bytes=_DEFAULT_BUFFER_BYTES):
    """Per-(sample, class) dice loss with the channel softmax fused in.

    pr: [N, C, S] logits (any float dtype); tg: [N, C, S] (streamed in its
    native dtype, upcast to f32 in-register).  Returns f32 [N, C].
    """
    n, c, s = pr.shape
    assert tg.shape == (n, c, s)
    if tg.dtype == jnp.bool_:
        tg = tg.astype(jnp.bfloat16)     # 0/1 exact; keeps the HBM stream narrow

    # VMEM bytes per unit of tile_s per (sublane-padded) input buffer.
    per_col = max(_round_up(c, _sublane(a.dtype)) * jnp.dtype(a.dtype).itemsize
                  for a in (pr, tg))
    cap = max(128, (target_buffer_bytes // per_col) // 128 * 128)
    if s <= cap:
        tile_s = s                        # full extent: always a legal block shape
    else:
        tile_s = _round_up(_cdiv(s, _cdiv(s, cap)), 128)
    k_tiles = _cdiv(s, tile_s)
    masked = (s % tile_s) != 0
    acc_lanes = 128 if tile_s % 128 == 0 else 1

    kernel = functools.partial(_fused_dice_kernel, smooth=float(smooth),
                               power=power, s_total=s, masked=masked)

    bytes_accessed = (pr.size * jnp.dtype(pr.dtype).itemsize
                      + tg.size * jnp.dtype(tg.dtype).itemsize + n * c * 4)
    cost = pl.CostEstimate(flops=12 * n * c * s, transcendentals=n * c * s,
                           bytes_accessed=bytes_accessed)

    # TODO(synk): for N == 1 on v7x only one TensorCore gets work; a 2-way
    # parallel split of the spatial axis with a JAX-side finalize would fix it.
    out = pl.pallas_call(
        kernel,
        out_shape=jax.ShapeDtypeStruct((n, c, 1), jnp.float32),
        grid_spec=pltpu.PrefetchScalarGridSpec(
            num_scalar_prefetch=0,
            grid=(n, k_tiles),
            in_specs=[
                pl.BlockSpec((None, c, tile_s), lambda i, k: (i, 0, k)),
                pl.BlockSpec((None, c, tile_s), lambda i, k: (i, 0, k)),
            ],
            out_specs=pl.BlockSpec((None, c, 1), lambda i, k: (i, 0, 0)),
            scratch_shapes=[
                pltpu.VMEM((c, acc_lanes), jnp.float32),   # num accumulator
                pltpu.VMEM((c, acc_lanes), jnp.float32),   # den accumulator
            ],
        ),
        compiler_params=pltpu.CompilerParams(
            dimension_semantics=("parallel", "arbitrary"),
            vmem_limit_bytes=_VMEM_LIMIT_BYTES,
        ),
        cost_estimate=cost,
    )(pr, tg)
    return out[:, :, 0]


# ---------------------------------------------------------------------------
# Row-wise dice kernel (standalone BinaryDiceLoss)
# ---------------------------------------------------------------------------

def _rows_dice_kernel(p_ref, t_ref, out_ref, num_acc, den_acc, *,
                      smooth, power, d_total, masked):
    k = pl.program_id(1)

    @pl.when(k == 0)
    def _init():
        num_acc[...] = jnp.zeros_like(num_acc)
        den_acc[...] = jnp.zeros_like(den_acc)

    r, td = p_ref.shape
    p = p_ref[...].astype(jnp.float32)
    t = t_ref[...].astype(jnp.float32)
    if masked:
        col = lax.broadcasted_iota(jnp.int32, (r, td), 1) + k * td
        valid = col < d_total
        p = jnp.where(valid, p, 0.0)
        t = jnp.where(valid, t, 0.0)

    _accumulate(p, t, num_acc, den_acc, power)

    @pl.when(k == pl.num_programs(1) - 1)
    def _finalize():
        num = jnp.sum(num_acc[...], axis=1, keepdims=True) + jnp.float32(smooth)
        den = jnp.sum(den_acc[...], axis=1, keepdims=True) + jnp.float32(smooth)
        out_ref[...] = (1.0 - num / den).astype(out_ref.dtype)


def _binary_dice_rows(pr, tg, *, smooth, power,
                      target_buffer_bytes=_DEFAULT_BUFFER_BYTES, max_tile_r=1024):
    """Per-row dice loss for pr/tg of shape [R, D] (native dtypes) -> f32 [R].

    No padded copies: grids use cdiv, ragged feature tiles are masked in-kernel
    and ragged row tiles rely on Pallas dropping out-of-bounds output writes.
    """
    assert pr.shape == tg.shape
    r, d = pr.shape
    if tg.dtype == jnp.bool_:
        tg = tg.astype(jnp.bfloat16)

    sub = max(_sublane(pr.dtype), _sublane(tg.dtype))

    # Row tile: full extent when small; otherwise a multiple of `sub`, capped so
    # there are >= 2 row tiles (keeps both v7x TensorCores busy).
    if r < 2 * sub:
        tile_r = r
    else:
        tile_r = min(max_tile_r, _round_up(_cdiv(r, 2), sub))
    r_tiles = _cdiv(r, tile_r)

    per_col = max(_round_up(tile_r, _sublane(a.dtype)) * jnp.dtype(a.dtype).itemsize
                  for a in (pr, tg))
    cap = max(128, (target_buffer_bytes // per_col) // 128 * 128)
    if d <= cap:
        tile_d = d
    else:
        tile_d = _round_up(_cdiv(d, _cdiv(d, cap)), 128)
    d_tiles = _cdiv(d, tile_d)
    masked = (d % tile_d) != 0
    acc_lanes = 128 if tile_d % 128 == 0 else 1

    kernel = functools.partial(_rows_dice_kernel, smooth=float(smooth),
                               power=power, d_total=d, masked=masked)

    bytes_accessed = (pr.size * jnp.dtype(pr.dtype).itemsize
                      + tg.size * jnp.dtype(tg.dtype).itemsize + r * 4)
    cost = pl.CostEstimate(flops=6 * r * d, transcendentals=0,
                           bytes_accessed=bytes_accessed)

    out = pl.pallas_call(
        kernel,
        out_shape=jax.ShapeDtypeStruct((r, 1), jnp.float32),
        grid_spec=pltpu.PrefetchScalarGridSpec(
            num_scalar_prefetch=0,
            grid=(r_tiles, d_tiles),
            in_specs=[
                pl.BlockSpec((tile_r, tile_d), lambda i, k: (i, k)),
                pl.BlockSpec((tile_r, tile_d), lambda i, k: (i, k)),
            ],
            out_specs=pl.BlockSpec((tile_r, 1), lambda i, k: (i, 0)),
            scratch_shapes=[
                pltpu.VMEM((tile_r, acc_lanes), jnp.float32),
                pltpu.VMEM((tile_r, acc_lanes), jnp.float32),
            ],
        ),
        compiler_params=pltpu.CompilerParams(
            dimension_semantics=("parallel", "arbitrary"),
            vmem_limit_bytes=_VMEM_LIMIT_BYTES,
        ),
        cost_estimate=cost,
    )(pr, tg)
    return out[:, 0]


# ---------------------------------------------------------------------------
# Public wrappers matching the PyTorch modules
# ---------------------------------------------------------------------------

def binary_dice_loss(predict, target, *, smooth=1, p=2, reduction="mean"):
    """BinaryDiceLoss: predict/target of shape [N, *]."""
    assert predict.shape[0] == target.shape[0], \
        "predict & target batch size don't match"
    n = predict.shape[0]
    pr = predict.reshape(n, -1)
    tg = target.reshape(n, -1)
    loss = _binary_dice_rows(pr, tg, smooth=smooth, power=_normalize_power(p))
    if reduction == "mean":
        return jnp.mean(loss)
    elif reduction == "sum":
        return jnp.sum(loss)
    elif reduction == "none":
        return loss
    else:
        raise Exception("Unexpected reduction {}".format(reduction))


def dice_loss(predict, target, *, weight=None, ignore_index=None,
              smooth=1, p=2, reduction="mean"):
    """DiceLoss: softmax over channels (fused in-kernel), per-class
    BinaryDiceLoss, summed over non-ignored classes and divided by C."""
    assert predict.shape == target.shape, "predict & target shape do not match"
    n, c = predict.shape[0], predict.shape[1]
    s = int(math.prod(predict.shape[2:]))
    power = _normalize_power(p)

    pr = predict.reshape(n, c, s)
    tg = target.reshape(n, c, s)
    per_nc = _fused_dice(pr, tg, smooth=smooth, power=power)   # [n, c]

    if reduction == "mean":
        per_class = jnp.mean(per_nc, axis=0)        # [c]
    elif reduction == "sum":
        per_class = jnp.sum(per_nc, axis=0)         # [c]
    elif reduction == "none":
        per_class = per_nc.T                        # [c, n]
    else:
        raise Exception("Unexpected reduction {}".format(reduction))

    if weight is not None:
        weight = jnp.asarray(weight)
        assert weight.shape[0] == c, \
            "Expect weight shape [{}], get[{}]".format(c, weight.shape[0])
        w = weight.reshape((c,) + (1,) * (per_class.ndim - 1)).astype(per_class.dtype)
        per_class = per_class * w

    include = [i for i in range(c) if i != ignore_index]
    total_loss = per_class[jnp.asarray(include)].sum(axis=0)
    return total_loss / c


# ---------------------------------------------------------------------------
# Pure-JAX references (for verification only)
# ---------------------------------------------------------------------------

def _binary_dice_reference(predict, target, *, smooth=1, p=2, reduction="mean"):
    n = predict.shape[0]
    pr = predict.reshape(n, -1).astype(jnp.float32)
    tg = target.reshape(n, -1).astype(jnp.float32)
    num = jnp.sum(pr * tg, axis=1) + smooth
    den = jnp.sum(pr ** p + tg ** p, axis=1) + smooth
    loss = 1.0 - num / den
    if reduction == "mean":
        return loss.mean()
    if reduction == "sum":
        return loss.sum()
    return loss


def _fused_dice_reference(pr, tg, *, smooth, power):
    probs = jax.nn.softmax(pr.astype(jnp.float32), axis=1)
    tgf = tg.astype(jnp.float32)
    num = jnp.sum(probs * tgf, axis=2) + smooth
    den = jnp.sum(probs ** power + tgf ** power, axis=2) + smooth
    return 1.0 - num / den


def _dice_loss_reference(predict, target, *, weight=None, ignore_index=None,
                         smooth=1, p=2, reduction="mean"):
    n, c = predict.shape[0], predict.shape[1]
    probs = jax.nn.softmax(predict.astype(jnp.float32), axis=1)
    total = 0.0
    for i in range(c):
        if i == ignore_index:
            continue
        pr = probs[:, i].reshape(n, -1)
        tg = target[:, i].reshape(n, -1).astype(jnp.float32)
        num = jnp.sum(pr * tg, axis=1) + smooth
        den = jnp.sum(pr ** p + tg ** p, axis=1) + smooth
        l = 1.0 - num / den
        if reduction == "mean":
            l = l.mean()
        elif reduction == "sum":
            l = l.sum()
        if weight is not None:
            l = l * weight[i]
        total = total + l
    return total / c


if __name__ == "__main__":
    key = jax.random.PRNGKey(0)
    k1, k2, k3, k4 = jax.random.split(key, 4)
    N, C, H, W = 2, 4, 16, 16

    predict = jax.random.normal(k1, (N, C, H, W), jnp.float32)
    labels = jax.random.randint(k2, (N, H, W), 0, C)
    # Targets streamed in a narrow native dtype (one-hot 0/1 is exact in bf16).
    target = jax.nn.one_hot(labels, C, axis=1, dtype=jnp.bfloat16)   # [N, C, H, W]

    # Fused softmax + dice (DiceLoss forward).
    out = jax.block_until_ready(dice_loss(predict, target, smooth=1, p=2,
                                          reduction="mean"))
    ref = _dice_loss_reference(predict, target, smooth=1, p=2, reduction="mean")
    assert jnp.allclose(out, ref, rtol=1e-4, atol=1e-5), (out, ref)

    # Standalone BinaryDiceLoss path (R=2 rows, D=4096 features, mixed dtypes).
    bp = jax.nn.sigmoid(predict)
    bd = jax.block_until_ready(binary_dice_loss(bp, target, smooth=1, p=2,
                                                reduction="mean"))
    bd_ref = _binary_dice_reference(bp, target, smooth=1, p=2, reduction="mean")
    assert jnp.allclose(bd, bd_ref, rtol=1e-4, atol=1e-5), (bd, bd_ref)

    # Exercise the ragged-tile (in-kernel masking) paths with a tiny budget.
    pr2 = jax.random.normal(k3, (8, 300), jnp.float32)
    tg2 = (jax.random.uniform(k4, (8, 300)) > 0.5).astype(jnp.float32)
    rag = jax.block_until_ready(
        _binary_dice_rows(pr2, tg2, smooth=1, power=2, target_buffer_bytes=4096))
    num2 = jnp.sum(pr2 * tg2, axis=1) + 1.0
    den2 = jnp.sum(pr2 ** 2 + tg2 ** 2, axis=1) + 1.0
    assert jnp.allclose(rag, 1.0 - num2 / den2, rtol=1e-4, atol=1e-5)

    pr3 = jax.random.normal(k3, (2, 4, 300), jnp.float32)
    tg3 = jax.nn.one_hot(jax.random.randint(k4, (2, 300), 0, 4), 4, axis=1,
                         dtype=jnp.bfloat16)
    fused_rag = jax.block_until_ready(
        _fused_dice(pr3, tg3, smooth=1, power=2, target_buffer_bytes=4096))
    fused_ref = _fused_dice_reference(pr3, tg3, smooth=1, power=2)
    assert jnp.allclose(fused_rag, fused_ref, rtol=1e-4, atol=1e-5)

    print("KERNEL_OK")
</pallas_src>

<mosaic_0001>
module attributes {stable_mosaic.version = 11 : i64} {
  func.func @_fused_dice_kernel(%arg0: i32, %arg1: i32, %arg2: memref<1x4x256xf32, #tpu.memory_space<vmem>>, %arg3: memref<1x4x256xbf16, #tpu.memory_space<vmem>>, %arg4: memref<1x4x1xf32, #tpu.memory_space<vmem>>, %arg5: memref<4x128xf32, #tpu.memory_space<vmem>>, %arg6: memref<4x128xf32, #tpu.memory_space<vmem>>) attributes {dimension_semantics = [#tpu.dimension_semantics<parallel>, #tpu.dimension_semantics<arbitrary>], iteration_bounds = array<i64: 2, 1>, scalar_prefetch = 0 : i64, scratch_operands = 2 : i64, tpu.core_type = #tpu.core_type<tc>, window_params = [{transform_indices = @transform_0, window_bounds = array<i64: 1, 4, 256>}, {transform_indices = @transform_1, window_bounds = array<i64: 1, 4, 256>}, {transform_indices = @transform_2, window_bounds = array<i64: 1, 4, 1>}]} {
    %c0_i32 = arith.constant 0 : i32
    %0 = arith.cmpi eq, %arg1, %c0_i32 : i32
    %1 = arith.extui %0 : i1 to i32
    %c0_i32_0 = arith.constant 0 : i32
    %2 = arith.cmpi ne, %1, %c0_i32_0 : i32
    scf.if %2 {
      %cst_17 = arith.constant 0.000000e+00 : f32
      %40 = vector.broadcast %cst_17 : f32 to vector<4x128xf32>
      %c0_18 = arith.constant 0 : index
      %c0_19 = arith.constant 0 : index
      %41 = vector.load %arg5[%c0_18, %c0_19] : memref<4x128xf32, #tpu.memory_space<vmem>>, vector<4x128xf32>
      tpu.vector_store %arg5[%c0_18, %c0_19], %40 {strides = array<i32>} : memref<4x128xf32, #tpu.memory_space<vmem>>, vector<4x128xf32>,
      %cst_20 = arith.constant 0.000000e+00 : f32
      %42 = vector.broadcast %cst_20 : f32 to vector<4x128xf32>
      %c0_21 = arith.constant 0 : index
      %c0_22 = arith.constant 0 : index
      %43 = vector.load %arg6[%c0_21, %c0_22] : memref<4x128xf32, #tpu.memory_space<vmem>>, vector<4x128xf32>
      tpu.vector_store %arg6[%c0_21, %c0_22], %42 {strides = array<i32>} : memref<4x128xf32, #tpu.memory_space<vmem>>, vector<4x128xf32>,
    } else {
    }
    %c0 = arith.constant 0 : index
    %c0_1 = arith.constant 0 : index
    %c0_2 = arith.constant 0 : index
    %3 = vector.load %arg2[%c0, %c0_1, %c0_2] : memref<1x4x256xf32, #tpu.memory_space<vmem>>, vector<1x4x256xf32>
    %4 = vector.shape_cast %3 : vector<1x4x256xf32> to vector<4x256xf32>
    %cst = arith.constant dense<0xFF800000> : vector<256xf32>
    %5 = vector.multi_reduction <maximumf>, %4, %cst [0] : vector<4x256xf32> to vector<256xf32>
    %6 = vector.shape_cast %5 : vector<256xf32> to vector<1x256xf32>
    %7 = vector.broadcast %6 : vector<1x256xf32> to vector<4x256xf32>
    %8 = arith.subf %4, %7 : vector<4x256xf32>
    %9 = math.exp %8 : vector<4x256xf32>
    %cst_3 = arith.constant dense<0.000000e+00> : vector<256xf32>
    %10 = vector.multi_reduction <add>, %9, %cst_3 [0] : vector<4x256xf32> to vector<256xf32>
    %11 = vector.shape_cast %10 : vector<256xf32> to vector<1x256xf32>
    %12 = vector.broadcast %11 : vector<1x256xf32> to vector<4x256xf32>
    %13 = arith.divf %9, %12 : vector<4x256xf32>
    %c0_4 = arith.constant 0 : index
    %c0_5 = arith.constant 0 : index
    %c0_6 = arith.constant 0 : index
    %14 = vector.load %arg3[%c0_4, %c0_5, %c0_6] : memref<1x4x256xbf16, #tpu.memory_space<vmem>>, vector<1x4x256xbf16>
    %15 = vector.shape_cast %14 : vector<1x4x256xbf16> to vector<4x256xbf16>
    %16 = arith.extf %15 : vector<4x256xbf16> to vector<4x256xf32>
    %17 = vector.extract_strided_slice %13 {offsets = [0, 0], sizes = [4, 128], strides = [1, 1]} : vector<4x256xf32> to vector<4x128xf32>
    %18 = vector.extract_strided_slice %16 {offsets = [0, 0], sizes = [4, 128], strides = [1, 1]} : vector<4x256xf32> to vector<4x128xf32>
    %19 = arith.mulf %17, %18 : vector<4x128xf32>
    %20 = arith.mulf %17, %17 : vector<4x128xf32>
    %21 = arith.mulf %18, %18 : vector<4x128xf32>
    %22 = arith.addf %20, %21 : vector<4x128xf32>
    %23 = vector.extract_strided_slice %13 {offsets = [0, 128], sizes = [4, 128], strides = [1, 1]} : vector<4x256xf32> to vector<4x128xf32>
    %24 = vector.extract_strided_slice %16 {offsets = [0, 128], sizes = [4, 128], strides = [1, 1]} : vector<4x256xf32> to vector<4x128xf32>
    %25 = arith.mulf %23, %24 : vector<4x128xf32>
    %26 = arith.mulf %23, %23 : vector<4x128xf32>
    %27 = arith.mulf %24, %24 : vector<4x128xf32>
    %28 = arith.addf %26, %27 : vector<4x128xf32>
    %c0_7 = arith.constant 0 : index
    %c0_8 = arith.constant 0 : index
    %29 = vector.load %arg5[%c0_7, %c0_8] : memref<4x128xf32, #tpu.memory_space<vmem>>, vector<4x128xf32>
    %30 = arith.addf %19, %25 : vector<4x128xf32>
    %31 = arith.addf %29, %30 : vector<4x128xf32>
    %c0_9 = arith.constant 0 : index
    %c0_10 = arith.constant 0 : index
    %32 = vector.load %arg5[%c0_9, %c0_10] : memref<4x128xf32, #tpu.memory_space<vmem>>, vector<4x128xf32>
    tpu.vector_store %arg5[%c0_9, %c0_10], %31 {strides = array<i32>} : memref<4x128xf32, #tpu.memory_space<vmem>>, vector<4x128xf32>,
    %c0_11 = arith.constant 0 : index
    %c0_12 = arith.constant 0 : index
    %33 = vector.load %arg6[%c0_11, %c0_12] : memref<4x128xf32, #tpu.memory_space<vmem>>, vector<4x128xf32>
    %34 = arith.addf %22, %28 : vector<4x128xf32>
    %35 = arith.addf %33, %34 : vector<4x128xf32>
    %c0_13 = arith.constant 0 : index
    %c0_14 = arith.constant 0 : index
    %36 = vector.load %arg6[%c0_13, %c0_14] : memref<4x128xf32, #tpu.memory_space<vmem>>, vector<4x128xf32>
    tpu.vector_store %arg6[%c0_13, %c0_14], %35 {strides = array<i32>} : memref<4x128xf32, #tpu.memory_space<vmem>>, vector<4x128xf32>,
    %c0_i32_15 = arith.constant 0 : i32
    %37 = arith.cmpi eq, %arg1, %c0_i32_15 : i32
    %38 = arith.extui %37 : i1 to i32
    %c0_i32_16 = arith.constant 0 : i32
    %39 = arith.cmpi ne, %38, %c0_i32_16 : i32
    scf.if %39 {
      %c0_17 = arith.constant 0 : index
      %c0_18 = arith.constant 0 : index
      %40 = vector.load %arg5[%c0_17, %c0_18] : memref<4x128xf32, #tpu.memory_space<vmem>>, vector<4x128xf32>
      %cst_19 = arith.constant dense<0.000000e+00> : vector<4xf32>
      %41 = vector.multi_reduction <add>, %40, %cst_19 [1] : vector<4x128xf32> to vector<4xf32>
      %42 = vector.shape_cast %41 : vector<4xf32> to vector<4x1xf32>
      %cst_20 = arith.constant 1.000000e+00 : f32
      %43 = vector.broadcast %cst_20 : f32 to vector<4x1xf32>
      %44 = arith.addf %42, %43 : vector<4x1xf32>
      %c0_21 = arith.constant 0 : index
      %c0_22 = arith.constant 0 : index
      %45 = vector.load %arg6[%c0_21, %c0_22] : memref<4x128xf32, #tpu.memory_space<vmem>>, vector<4x128xf32>
      %cst_23 = arith.constant dense<0.000000e+00> : vector<4xf32>
      %46 = vector.multi_reduction <add>, %45, %cst_23 [1] : vector<4x128xf32> to vector<4xf32>
      %47 = vector.shape_cast %46 : vector<4xf32> to vector<4x1xf32>
      %cst_24 = arith.constant 1.000000e+00 : f32
      %48 = vector.broadcast %cst_24 : f32 to vector<4x1xf32>
      %49 = arith.addf %47, %48 : vector<4x1xf32>
      %50 = arith.divf %44, %49 : vector<4x1xf32>
      %cst_25 = arith.constant 1.000000e+00 : f32
      %51 = vector.broadcast %cst_25 : f32 to vector<4x1xf32>
      %52 = arith.subf %51, %50 : vector<4x1xf32>
      %c0_26 = arith.constant 0 : index
      %c0_27 = arith.constant 0 : index
      %c0_28 = arith.constant 0 : index
      %53 = vector.load %arg4[%c0_26, %c0_27, %c0_28] : memref<1x4x1xf32, #tpu.memory_space<vmem>>, vector<1x4x1xf32>
      %54 = vector.shape_cast %53 : vector<1x4x1xf32> to vector<4x1xf32>
      %55 = vector.shape_cast %52 : vector<4x1xf32> to vector<1x4x1xf32>
      tpu.vector_store %arg4[%c0_26, %c0_27, %c0_28], %55 {strides = array<i32>} : memref<1x4x1xf32, #tpu.memory_space<vmem>>, vector<1x4x1xf32>,
    } else {
    }
    return
  }
  func.func @transform_0(%arg0: i32, %arg1: i32) -> (i32, i32, i32) {
    %c0_i32 = arith.constant 0 : i32
    %c0_i32_0 = arith.constant 0 : i32
    return %arg0, %c0_i32, %arg1 : i32, i32, i32
  }
  func.func @transform_1(%arg0: i32, %arg1: i32) -> (i32, i32, i32) {
    %c0_i32 = arith.constant 0 : i32
    %c0_i32_0 = arith.constant 0 : i32
    return %arg0, %c0_i32, %arg1 : i32, i32, i32
  }
  func.func @transform_2(%arg0: i32, %arg1: i32) -> (i32, i32, i32) {
    %c0_i32 = arith.constant 0 : i32
    %c0_i32_0 = arith.constant 0 : i32
    %c0_i32_1 = arith.constant 0 : i32
    return %arg0, %c0_i32, %c0_i32_0 : i32, i32, i32
  }
}

</mosaic_0001>

<llo_original>
// kernel: tpu_custom_call.1
$region0: #{tpu_custom_call.1}
  #allocation0 [shape = 'u32[]', space=smem, size = 0x4, offset = 0x4, fixed_abs, tag = 'smem constant byte address 0x4 - core index']
  #allocation1 [shape = 'u32[144,128]{1,0:T(1,128)}', space=vmem, size = 0x12000, scoped, tag = 'internal scratch']
  #allocation2 [shape = 'f32[4,128]{1,0:T(4,128)}', space=vmem, size = 0x800, scoped, tag = 'scratch operand']
  #allocation3 [shape = 'f32[4,128]{1,0:T(4,128)}', space=vmem, size = 0x800, scoped, tag = 'scratch operand']
  %s0 = inlined_call_operand.hbm [shape: f32[2,4,256], index: 0, kind: input, shape index: {}]
  %s1 = inlined_call_operand.hbm [shape: bf16[2,4,256], index: 1, kind: input, shape index: {}]
  %s2 = inlined_call_operand.vmem [shape: f32[2,4,1], index: 2, kind: output, shape index: {}]
  %s3 = sld [smem:[#allocation0]]
  $region57: #{tpu_custom_call.1} parent=0
    _
  %s5 = ssub.s32 1, %s3
  %s6 = scalar_select 0, %s5, %s3
  $region1: #{tpu_custom_call.1} parent=0
    #allocation4 [shape = 'u8[8192]{0}', space=vmem, size = 0x2000, scoped, tag = 'input window, operand 0']
    #allocation5 [shape = 's32[2]{0}', space=sflag, size = 0x8, scoped, tag = 'scoped memory for tpu_custom_call.1']
    #allocation6 [shape = 'u8[4096]{0}', space=vmem, size = 0x1000, scoped, tag = 'input window, operand 1']
    #allocation7 [shape = 's32[2]{0}', space=sflag, size = 0x8, scoped, tag = 'scoped memory for tpu_custom_call.1']
    %7 = vsyncpa [#allocation5], 0
    %s8 = scalar_lea.sflag [#allocation5], 1
    %9 = vsyncpa %s8, 0
    %10 = vsyncpa [#allocation7], 0
    %s11 = scalar_lea.sflag [#allocation7], 1
    %12 = vsyncpa %s11, 0
    loop: start=0, step=1, limit=4
    $region2: #{tpu_custom_call.1} parent=1 // loop_pre_header
      _
    $region3: #{tpu_custom_call.1} parent=1 // loop_header
      %s14 = sphi 0, %s18
      %p15 = scmp.ge.s32.totalorder %s14, 4
      %s21 = sphi 0, %s33
      %s22 = sphi 0, %s29
      %s23 = sphi 0, %s21
      %s24 = sphi 0, %s22
      %s25 = sphi 0, %s23
      %s26 = sphi 0, %s24
      %s38 = sphi 0, %s40
      %s41 = sphi 0, %s38
      %s42 = sphi 0, %s41
      %s58 = sphi 0, %s42
      %s66 = sphi 0, %s68
      %s69 = sphi 0, %s66
      %s70 = sphi 0, %s69
      %s86 = sphi 0, %s70
      %s92 = sphi 0, %s94
      %s95 = sphi 0, %s92
      %s96 = sphi 0, %s95
      %s112 = sphi 0, %s96
    $region4: #{tpu_custom_call.1} parent=1 // loop_header_branch
      %17 = sbr.rel (%p15) target = $region8
    $region5: #{tpu_custom_call.1} parent=1 // loop_body
      %s19 = ssub.s32 %s14, 1
      %s20 = ssub.s32 %s14, 2
      %s27 = sadd.s32 1, %s22
      %p28 = scmp.ge.s32.totalorder %s27, 1
      %s29 = scalar_select %p28, 0, %s27
      %s30 = sadd.s32 1, %s21
      %s31 = scalar_select %p28, %s30, %s21
      %p32 = scmp.ge.s32.totalorder %s31, 2
      %s33 = scalar_select %p32, 0, %s31
      %s34 = ssub.s32 %s21, %s33
      %s35 = ssub.s32 %s22, %s29
      %s36 = sor.u32 %s34, %s35
      %p37 = scmp.eq.s32.totalorder %s36, 0
      %s39 = sadd.s32 %s38, 1
      %s40 = scalar_select %p37, %s38, %s39
      %p43 = pneg %p37
      %p44 = scmp.eq.s32.totalorder %s14, 1
      %p45 = por %p43, %p44
      %p46 = scmp.ne.s32.totalorder %s38, %s41
      %p47 = scmp.eq.s32.totalorder %s14, 0
      %p48 = por %p46, %p47
      %p49 = scmp.ne.s32.totalorder %s38, %s41
      %p50 = scmp.eq.s32.totalorder %s19, 1
      %p51 = por %p49, %p50
      %p52 = scmp.ne.s32.totalorder %s41, %s42
      %p53 = scmp.eq.s32.totalorder %s19, 0
      %p54 = por %p52, %p53
      %p55 = scmp.ne.s32.totalorder %s41, %s42
      %p56 = scmp.eq.s32.totalorder %s20, 1
      %p57 = por %p55, %p56
      %p59 = scmp.ne.s32.totalorder %s42, %s58
      %p60 = scmp.eq.s32.totalorder %s20, 0
      %p61 = por %p59, %p60
      %s62 = ssub.s32 %s21, %s33
      %s63 = ssub.s32 %s22, %s29
      %s64 = sor.u32 %s62, %s63
      %p65 = scmp.eq.s32.totalorder %s64, 0
      %s67 = sadd.s32 %s66, 1
      %s68 = scalar_select %p65, %s66, %s67
      %p71 = pneg %p65
      %p72 = scmp.eq.s32.totalorder %s14, 1
      %p73 = por %p71, %p72
      %p74 = scmp.ne.s32.totalorder %s66, %s69
      %p75 = scmp.eq.s32.totalorder %s14, 0
      %p76 = por %p74, %p75
      %p77 = scmp.ne.s32.totalorder %s66, %s69
      %p78 = scmp.eq.s32.totalorder %s19, 1
      %p79 = por %p77, %p78
      %p80 = scmp.ne.s32.totalorder %s69, %s70
      %p81 = scmp.eq.s32.totalorder %s19, 0
      %p82 = por %p80, %p81
      %p83 = scmp.ne.s32.totalorder %s69, %s70
      %p84 = scmp.eq.s32.totalorder %s20, 1
      %p85 = por %p83, %p84
      %p87 = scmp.ne.s32.totalorder %s70, %s86
      %p88 = scmp.eq.s32.totalorder %s20, 0
      %p89 = por %p87, %p88
      %s90 = ssub.s32 %s21, %s33
      %p91 = scmp.eq.s32.totalorder %s90, 0
      %s93 = sadd.s32 %s92, 1
      %s94 = scalar_select %p91, %s92, %s93
      %p97 = pneg %p91
      %p98 = scmp.eq.s32.totalorder %s14, 1
      %p99 = por %p97, %p98
      %p100 = scmp.ne.s32.totalorder %s92, %s95
      %p101 = scmp.eq.s32.totalorder %s14, 0
      %p102 = por %p100, %p101
      %p103 = scmp.ne.s32.totalorder %s92, %s95
      %p104 = scmp.eq.s32.totalorder %s19, 1
      %p105 = por %p103, %p104
      %p106 = scmp.ne.s32.totalorder %s95, %s96
      %p107 = scmp.eq.s32.totalorder %s19, 0
      %p108 = por %p106, %p107
      %p109 = scmp.ne.s32.totalorder %s95, %s96
      %p110 = scmp.eq.s32.totalorder %s20, 1
      %p111 = por %p109, %p110
      %p113 = scmp.ne.s32.totalorder %s96, %s112
      %p114 = scmp.eq.s32.totalorder %s20, 0
      %p115 = por %p113, %p114
      %p116 = scmp.le.s32.totalorder 1, %s14
      %p117 = scmp.lt.s32.totalorder %s14, 3
      %p118 = pnand %p116, %p117
      %p119 = pneg %p118
      // Predicated region
      $region9: #{tpu_custom_call.1} parent=5 // pred_check
        _
      $region10: #{tpu_custom_call.1} parent=5 // pred_check_branch
        %121 = sbr.rel (%p118) target = $region12
      $region11: #{tpu_custom_call.1} parent=5 // pred_region
        %s122 = ssub.s32 %s14, 1
      $region12: #{tpu_custom_call.1} parent=5 // pred_fallthru
        _
      %p123 = scmp.lt.s32.totalorder %s14, 2
      // Predicated region
      $region13: #{tpu_custom_call.1} parent=5 // pred_check
        %p124 = pneg %p123
      $region14: #{tpu_custom_call.1} parent=5 // pred_check_branch
        %126 = sbr.rel (%p124) target = $region16
      $region15: #{tpu_custom_call.1} parent=5 // pred_region
        // Predicated region
        $region17: #{tpu_custom_call.1} parent=15 // pred_check
          %p127 = pneg %p48
        $region18: #{tpu_custom_call.1} parent=15 // pred_check_branch
          %129 = sbr.rel (%p127) target = $region20
        $region19: #{tpu_custom_call.1} parent=15 // pred_region
          %s130 = sand.u32 %s38, 1
          %s131 = scalar_lea.sflag [#allocation5], %s130
          %s132 = sand.u32 %s38, 1
          %s133 = smul.addr %s132, 8
          %s134 = scalar_lea.vmem [#allocation4], %s133
          %s135 = smul.u32 2, %s22
          %s137 = ssub.s32 128, 128
          %138 = vsyncadd %s131, %s137
          %s139 = smul.addr %s21, 2
          %s140 = sadd.s32 %s135, %s139
          %s141 = smul.addr %s140, 64
          %s142 = scalar_lea.hbm %s0, %s141
          %s144 = sshll.u32 %s134, 4
          %s145 = int_to_ptr.vmem [resolvable:$true] %s144
          %147 = dma.hbm_to_vmem [thread:$0]  %s142, 128, %s145, %s131
        $region20: #{tpu_custom_call.1} parent=15 // pred_fallthru
          _
        // Predicated region
        $region21: #{tpu_custom_call.1} parent=15 // pred_check
          %p148 = pneg %p76
        $region22: #{tpu_custom_call.1} parent=15 // pred_check_branch
          %150 = sbr.rel (%p148) target = $region24
        $region23: #{tpu_custom_call.1} parent=15 // pred_region
          %s151 = sand.u32 %s66, 1
          %s152 = scalar_lea.sflag [#allocation7], %s151
          %s153 = sand.u32 %s66, 1
          %s154 = smul.addr %s153, 4
          %s155 = scalar_lea.vmem [#allocation6], %s154
          %s156 = smul.u32 2, %s22
          %s158 = ssub.s32 64, 64
          %159 = vsyncadd %s152, %s158
          %s160 = smul.addr %s21, 2
          %s161 = sadd.s32 %s156, %s160
          %s162 = smul.addr %s161, 32
          %s163 = scalar_lea.hbm %s1, %s162
          %s165 = sshll.u32 %s155, 4
          %s166 = int_to_ptr.vmem [resolvable:$true] %s165
          %168 = dma.hbm_to_vmem [thread:$0]  %s163, 64, %s166, %s152
        $region24: #{tpu_custom_call.1} parent=15 // pred_fallthru
          _
      $region16: #{tpu_custom_call.1} parent=5 // pred_fallthru
        _
      %p169 = scmp.le.s32.totalorder 1, %s14
      %p170 = scmp.lt.s32.totalorder %s14, 3
      %p171 = pnand %p169, %p170
      %p172 = pneg %p171
      // Predicated region
      $region25: #{tpu_custom_call.1} parent=5 // pred_check
        _
      $region26: #{tpu_custom_call.1} parent=5 // pred_check_branch
        %174 = sbr.rel (%p171) target = $region28
      $region27: #{tpu_custom_call.1} parent=5 // pred_region
        %s175 = ssub.s32 %s14, 1
        %s176 = sand.u32 %s41, 1
        %s177 = scalar_lea.sflag [#allocation5], %s176
        %s178 = sand.u32 %s41, 1
        %s179 = smul.addr %s178, 8
        %s180 = scalar_lea.vmem [#allocation4], %s179
        // Predicated region
        $region29: #{tpu_custom_call.1} parent=27 // pred_check
          %p181 = pneg %p54
        $region30: #{tpu_custom_call.1} parent=27 // pred_check_branch
          %183 = sbr.rel (%p181) target = $region32
        $region31: #{tpu_custom_call.1} parent=27 // pred_region
          %184 = dma.done %s177, 128
        $region32: #{tpu_custom_call.1} parent=27 // pred_fallthru
          _
        %s185 = sand.u32 %s69, 1
        %s186 = scalar_lea.sflag [#allocation7], %s185
        %s187 = sand.u32 %s69, 1
        %s188 = smul.addr %s187, 4
        %s189 = scalar_lea.vmem [#allocation6], %s188
        // Predicated region
        $region33: #{tpu_custom_call.1} parent=27 // pred_check
          %p190 = pneg %p82
        $region34: #{tpu_custom_call.1} parent=27 // pred_check_branch
          %192 = sbr.rel (%p190) target = $region36
        $region35: #{tpu_custom_call.1} parent=27 // pred_region
          %193 = dma.done %s186, 64
        $region36: #{tpu_custom_call.1} parent=27 // pred_fallthru
          _
        %s194 = sand.u32 %s41, 1
        %s195 = scalar_lea.sflag [#allocation5], %s194
        %s196 = sand.u32 %s41, 1
        %s197 = smul.addr %s196, 8
        %s198 = scalar_lea.vmem [#allocation4], %s197
        %p199 = pneg %p54
        %p200 = pneg %p51
        %s201 = sand.u32 %s69, 1
        %s202 = scalar_lea.sflag [#allocation7], %s201
        %s203 = sand.u32 %s69, 1
        %s204 = smul.addr %s203, 4
        %s205 = scalar_lea.vmem [#allocation6], %s204
        %p206 = pneg %p82
        %p207 = pneg %p79
        %p208 = pneg %p108
        %p209 = pneg %p105
        %p210 = scmp.lt.s32.totalorder %s23, 1
        %s211 = scalar_select %p210, %s23, 1
        %s212 = smul.addr %s211, 4
        %s213 = scalar_lea.vmem %s2, %s212
        %s214 = smul.u32 2, %s24
        %s215 = smul.u32 2, %s24
        %p216 = scmp.lt.s32.totalorder %s23, 1
        %s217 = scalar_select %p216, %s23, 1
        %s218 = smul.addr %s217, 4
        %s219 = scalar_lea.vmem %s2, %s218
        %p220 = scmp.eq.s32.totalorder %s24, 0
        // Predicated region
        $region37: #{tpu_custom_call.1} parent=27 // pred_check
          %p221 = pneg %p220
        $region38: #{tpu_custom_call.1} parent=27 // pred_check_branch
          %223 = sbr.rel (%p221) target = $region40
        $region39: #{tpu_custom_call.1} parent=27 // pred_region
          %224 = vst [vmem:[#allocation2] sm:$0xf] 0.0
          %225 = vst [vmem:[#allocation3] sm:$0xf] 0.0
        $region40: #{tpu_custom_call.1} parent=27 // pred_fallthru
          _
        %v226 = vld [vmem:[%s180] sm:$0xff]
        %v228 = vcombine.high %v226, %v226
        %vm230 = vcmask 1043456
        %v231 = vsel %vm230, %v226, -inf
        %v232 = vrot.slane %v231, 4
        %v233 = vmax.f32 %v231, %v232
        %v234 = vrot.slane %v233, 2
        %v235 = vmax.f32 %v233, %v234
        %v236 = vrot.slane %v235, 1
        %v237 = vmax.f32 %v235, %v236
        %v238 = vsel %vm230, %v228, -inf
        %v239 = vrot.slane %v238, 4
        %v240 = vmax.f32 %v238, %v239
        %v241 = vrot.slane %v240, 2
        %v242 = vmax.f32 %v240, %v241
        %v243 = vrot.slane %v242, 1
        %v244 = vmax.f32 %v242, %v243
        %v247 = vcombine.low %v237, %v244
        %v249 = vsub.f32 %v226, %v247
        %v250 = vmul.f32 %v249, 1.442695
        %v251 = vpow.pop %v250
        %v253 = vcombine.high %v251, %v251
        %v255 = vsel %vm230, %v251, 0.0
        %v256 = vrot.slane %v255, 4
        %v257 = vadd.f32 %v255, %v256
        %v258 = vrot.slane %v257, 2
        %v259 = vadd.f32 %v257, %v258
        %v260 = vrot.slane %v259, 1
        %v261 = vadd.f32 %v259, %v260
        %v262 = vsel %vm230, %v253, 0.0
        %v263 = vrot.slane %v262, 4
        %v264 = vadd.f32 %v262, %v263
        %v265 = vrot.slane %v264, 2
        %v266 = vadd.f32 %v264, %v265
        %v267 = vrot.slane %v266, 1
        %v268 = vadd.f32 %v266, %v267
        %v271 = vcombine.low %v261, %v268
        %v273 = vrcp.pop %v271
        %v274 = vmul.f32 %v251, %v273
        %v275 = vld [vmem:[%s189] sm:$0xf]
        %v276 = vunpack.c.l.bf16 %v275
        %v277 = vmul.f32 %v274, %v276
        %v278 = vmul.f32 %v274, %v274
        %v279 = vmul.f32 %v276, %v276
        %v280 = vadd.f32 %v278, %v279
        %v282 = vrot.slane %v274, 4
        %v285 = vrot.slane %v276, 4
        %v287 = vmul.f32 %v282, %v285
        %v288 = vmul.f32 %v282, %v282
        %v289 = vmul.f32 %v285, %v285
        %v290 = vadd.f32 %v288, %v289
        %v291 = vld [vmem:[#allocation2] sm:$0xf]
        %v292 = vadd.f32 %v277, %v287
        %v293 = vadd.f32 %v291, %v292
        %294 = vst [vmem:[#allocation2] sm:$0xf] %v293
        %v295 = vld [vmem:[#allocation3] sm:$0xf]
        %v296 = vadd.f32 %v280, %v290
        %v297 = vadd.f32 %v295, %v296
        %298 = vst [vmem:[#allocation3] sm:$0xf] %v297
        // Predicated region
        $region41: #{tpu_custom_call.1} parent=27 // pred_check
          %p299 = pneg %p220
        $region42: #{tpu_custom_call.1} parent=27 // pred_check_branch
          %301 = sbr.rel (%p299) target = $region44
        $region43: #{tpu_custom_call.1} parent=27 // pred_region
          %v302 = vld [vmem:[#allocation2] sm:$0xf]
          %v303 = vsel %vm230, %v302, 0.0
          %304 = vadd.xlane.f32.xlu0 %v303
          %v305 = vpop.xlane.xlu0 %304
          %v306 = vadd.f32 %v305, 1.0
          %v307 = vld [vmem:[#allocation3] sm:$0xf]
          %v308 = vsel %vm230, %v307, 0.0
          %309 = vadd.xlane.f32.xlu0 %v308
          %v310 = vpop.xlane.xlu0 %309
          %v311 = vadd.f32 %v310, 1.0
          %v312 = vrcp.pop %v311
          %v313 = vmul.f32 %v306, %v312
          %v314 = vsub.f32 1.0, %v313
          %vm315 = vcmask 3072
          %316 = vst.msk [vmem:[%s219] sm:$0xf] %vm315, %v314
        $region44: #{tpu_custom_call.1} parent=27 // pred_fallthru
          _
        %p317 = scmp.lt.s32.totalorder %s23, 1
        %s318 = scalar_select %p317, %s23, 1
        %s319 = smul.addr %s318, 4
        %s320 = scalar_lea.vmem %s2, %s319
        // Predicated region
        $region45: #{tpu_custom_call.1} parent=27 // pred_check
          %p321 = pneg %p105
        $region46: #{tpu_custom_call.1} parent=27 // pred_check_branch
          %323 = sbr.rel (%p321) target = $region48
        $region47: #{tpu_custom_call.1} parent=27 // pred_region
          _
        $region48: #{tpu_custom_call.1} parent=27 // pred_fallthru
          _
      $region28: #{tpu_custom_call.1} parent=5 // pred_fallthru
        _
      %p324 = scmp.le.s32.totalorder 2, %s14
      // Predicated region
      $region49: #{tpu_custom_call.1} parent=5 // pred_check
        %p325 = pneg %p324
      $region50: #{tpu_custom_call.1} parent=5 // pred_check_branch
        %327 = sbr.rel (%p325) target = $region52
      $region51: #{tpu_custom_call.1} parent=5 // pred_region
        %s328 = ssub.s32 %s14, 2
        // Predicated region
        $region53: #{tpu_custom_call.1} parent=51 // pred_check
          %p329 = pneg %p111
        $region54: #{tpu_custom_call.1} parent=51 // pred_check_branch
          %331 = sbr.rel (%p329) target = $region56
        $region55: #{tpu_custom_call.1} parent=51 // pred_region
          %p332 = scmp.lt.s32.totalorder %s25, 1
          %s333 = scalar_select %p332, %s25, 1
          %s334 = smul.addr %s333, 4
          %s335 = scalar_lea.vmem %s2, %s334
        $region56: #{tpu_custom_call.1} parent=51 // pred_fallthru
          _
      $region52: #{tpu_custom_call.1} parent=5 // pred_fallthru
        _
    $region6: #{tpu_custom_call.1} parent=1 // loop_footer
      %s18 = sadd.s32 1, %s14
    $region7: #{tpu_custom_call.1} parent=1 // loop_footer_branch
      %13 = sbr.rel target = $region3
    $region8: #{tpu_custom_call.1} parent=1 // loop_exit
      _
    %336 = vsyncpa [#allocation5], 1
    %s337 = scalar_lea.sflag [#allocation5], 1
    %338 = vsyncpa %s337, 1
    %339 = vsyncpa [#allocation7], 1
    %s340 = scalar_lea.sflag [#allocation7], 1
    %341 = vsyncpa %s340, 1

</llo_original>
